<compile_context>
chip_gen: v5e
topology: v5e:2x2
jax: 0.10.0
libtpu: 0.0.40
codegen_flags: <defaults>
</compile_context>

<pallas_src>
import functools

import jax
import jax.numpy as jnp
import numpy as np
from jax.experimental import pallas as pl
from jax.experimental.pallas import tpu as pltpu


# ---------------------------------------------------------------------------
# Pallas kernels
# ---------------------------------------------------------------------------
def _noisy_linear_train_kernel(x_ref, wmu_ref, wsig_ref, eps_out_ref,
                               eps_in_ref, bias_ref, o_ref, acc_ref):
    k = pl.program_id(2)

    @pl.when(k == 0)
    def _():
        acc_ref[...] = jnp.zeros_like(acc_ref)

    # Noisy weight tile (TN, TK): factorized noise via broadcast, f32 on VPU.
    # w[n, k] = w_mu[n, k] + w_sig[n, k] * eps_out[n] * eps_in[k]
    w = wmu_ref[...] + wsig_ref[...] * (eps_out_ref[...] * eps_in_ref[...])

    # MXU matmul: bf16 operands, f32 accumulate, contract lane-vs-lane
    # (dims ((1,),(1,))) so no transpose of w is ever materialized.
    acc_ref[...] += jax.lax.dot_general(
        x_ref[...].astype(jnp.bfloat16),
        w.astype(jnp.bfloat16),
        dimension_numbers=(((1,), (1,)), ((), ())),
        preferred_element_type=jnp.float32,
    )

    @pl.when(k == pl.num_programs(2) - 1)
    def _():
        # bias_ref is (3, TN): rows = [b_mu, b_sig, b_eps]
        b = bias_ref[0:1, :] + bias_ref[1:2, :] * bias_ref[2:3, :]   # (1, TN)
        o_ref[...] = (acc_ref[...] + b).astype(o_ref.dtype)


def _noisy_linear_eval_kernel(x_ref, wmu_ref, bmu_ref, o_ref, acc_ref):
    k = pl.program_id(2)

    @pl.when(k == 0)
    def _():
        acc_ref[...] = jnp.zeros_like(acc_ref)

    acc_ref[...] += jax.lax.dot_general(
        x_ref[...].astype(jnp.bfloat16),
        wmu_ref[...].astype(jnp.bfloat16),
        dimension_numbers=(((1,), (1,)), ((), ())),
        preferred_element_type=jnp.float32,
    )

    @pl.when(k == pl.num_programs(2) - 1)
    def _():
        o_ref[...] = (acc_ref[...] + bmu_ref[...]).astype(o_ref.dtype)


# ---------------------------------------------------------------------------
# Wrapper
# ---------------------------------------------------------------------------
def _round_up(n, m):
    return ((n + m - 1) // m) * m


def _pad_and_tile(dim, align, target):
    """Pad `dim` to `align`, choose tile <= target, re-pad so tile divides."""
    p = _round_up(dim, align)
    t = min(target, p)
    p = _round_up(p, t)
    return p, t


@functools.partial(jax.jit, static_argnames=("training",))
def noisy_linear_forward(x, params, training=True):
    """Forward pass of NoisyLinear.

    x:      (..., in_dim) float32
    params: dict with w_mu/w_sig (out, in), b_mu/b_sig (out,),
            eps_in (in,), eps_out (out,)   [factorized noise; w_eps = outer]
    """
    out_dim, in_dim = params["w_mu"].shape
    lead_shape = x.shape[:-1]
    x2 = x.reshape(-1, in_dim)           # flatten leading dims (linear semantics)
    B = x2.shape[0]

    # Tile targets: double-buffered working set (x + 2 weights) at f32 is
    # ~7 MiB, well inside the scoped-VMEM defaults on v5e/v6e/v7x.
    M_pad, TM = _pad_and_tile(B, 8, 256)
    K_pad, TK = _pad_and_tile(in_dim, 128, 1024)
    N_pad, TN = _pad_and_tile(out_dim, 128, 256)
    grid = (M_pad // TM, N_pad // TN, K_pad // TK)

    # Zero-pad to lane/sublane-aligned shapes (padding contributes 0 to the
    # matmul; padded output rows/cols are sliced off at the end).
    x_p = jnp.pad(x2, ((0, M_pad - B), (0, K_pad - in_dim)))
    w_mu = jnp.pad(params["w_mu"], ((0, N_pad - out_dim), (0, K_pad - in_dim)))
    b_mu = jnp.pad(params["b_mu"], (0, N_pad - out_dim))

    out_shape = jax.ShapeDtypeStruct((M_pad, N_pad), x.dtype)

    x_spec = pl.BlockSpec((TM, TK), lambda i, j, k: (i, k))
    w_spec = pl.BlockSpec((TN, TK), lambda i, j, k: (j, k))
    o_spec = pl.BlockSpec((TM, TN), lambda i, j, k: (i, j))
    acc_scratch = pltpu.VMEM((TM, TN), jnp.float32)
    cparams = pltpu.CompilerParams(
        dimension_semantics=("parallel", "parallel", "arbitrary"))

    if training:
        w_sig = jnp.pad(params["w_sig"],
                        ((0, N_pad - out_dim), (0, K_pad - in_dim)))
        eps_out = jnp.pad(params["eps_out"],
                          (0, N_pad - out_dim)).reshape(N_pad, 1)
        eps_in = jnp.pad(params["eps_in"],
                         (0, K_pad - in_dim)).reshape(1, K_pad)
        # One stacked bias array -> single DMA instead of 3 tiny ones.
        bias = jnp.stack([
            b_mu,
            jnp.pad(params["b_sig"], (0, N_pad - out_dim)),
            jnp.pad(params["eps_out"], (0, N_pad - out_dim)),   # b_eps = eps_out
        ])  # (3, N_pad)

        y = pl.pallas_call(
            _noisy_linear_train_kernel,
            out_shape=out_shape,
            grid_spec=pltpu.PrefetchScalarGridSpec(
                num_scalar_prefetch=0,
                grid=grid,
                in_specs=[
                    x_spec,
                    w_spec,                                           # w_mu
                    w_spec,                                           # w_sig
                    pl.BlockSpec((TN, 1), lambda i, j, k: (j, 0)),    # eps_out
                    pl.BlockSpec((1, TK), lambda i, j, k: (0, k)),    # eps_in
                    pl.BlockSpec((3, TN), lambda i, j, k: (0, j)),    # bias stack
                ],
                out_specs=o_spec,
                scratch_shapes=[acc_scratch]),
            compiler_params=cparams,
        )(x_p, w_mu, w_sig, eps_out, eps_in, bias)
    else:
        y = pl.pallas_call(
            _noisy_linear_eval_kernel,
            out_shape=out_shape,
            grid_spec=pltpu.PrefetchScalarGridSpec(
                num_scalar_prefetch=0,
                grid=grid,
                in_specs=[
                    x_spec,
                    w_spec,                                           # w_mu
                    pl.BlockSpec((1, TN), lambda i, j, k: (0, j)),    # b_mu
                ],
                out_specs=o_spec,
                scratch_shapes=[acc_scratch]),
            compiler_params=cparams,
        )(x_p, w_mu, b_mu.reshape(1, N_pad))

    return y[:B, :out_dim].reshape(*lead_shape, out_dim)


# ---------------------------------------------------------------------------
# Deterministic parameter / noise setup (mirrors __init__ + reset_params +
# reset_noise from the PyTorch module, but keeps the noise factorized).
# ---------------------------------------------------------------------------
def _scale_noise(key, size):
    g = jax.random.normal(key, (size,), dtype=jnp.float32)
    return jnp.sign(g) * jnp.sqrt(jnp.abs(g))


def init_noisy_linear(key, in_dim, out_dim, std_init=0.1):
    k_wmu, k_bmu, k_ein, k_eout = jax.random.split(key, 4)
    mu_range = 1.0 / np.sqrt(in_dim)

    w_mu = jax.random.uniform(k_wmu, (out_dim, in_dim), jnp.float32,
                              minval=-mu_range, maxval=mu_range)
    w_sig = jnp.full((out_dim, in_dim), std_init / np.sqrt(in_dim), jnp.float32)
    b_mu = jax.random.uniform(k_bmu, (out_dim,), jnp.float32,
                              minval=-mu_range, maxval=mu_range)
    b_sig = jnp.full((out_dim,), std_init / np.sqrt(out_dim), jnp.float32)

    # reset_noise: factorized Gaussian noise.  w_eps = outer(eps_out, eps_in)
    # is never materialized; the kernel forms it via broadcast.
    eps_in = _scale_noise(k_ein, in_dim)
    eps_out = _scale_noise(k_eout, out_dim)

    return dict(w_mu=w_mu, w_sig=w_sig, b_mu=b_mu, b_sig=b_sig,
                eps_in=eps_in, eps_out=eps_out)


# ---------------------------------------------------------------------------
# Main
# ---------------------------------------------------------------------------
if __name__ == "__main__":
    key = jax.random.PRNGKey(0)
    k_params, k_x = jax.random.split(key)

    B, IN_DIM, OUT_DIM = 8, 32, 16
    params = init_noisy_linear(k_params, IN_DIM, OUT_DIM, std_init=0.1)
    x = jax.random.normal(k_x, (B, IN_DIM), dtype=jnp.float32)

    # training-mode forward (noisy stream active)
    y_train = jax.block_until_ready(noisy_linear_forward(x, params, training=True))
    # eval-mode forward (deterministic stream only)
    y_eval = jax.block_until_ready(noisy_linear_forward(x, params, training=False))

    # ---------------- reference checks -------------------------------------
    w_eps = jnp.outer(params["eps_out"], params["eps_in"])
    w_noisy = params["w_mu"] + params["w_sig"] * w_eps
    b_noisy = params["b_mu"] + params["b_sig"] * params["eps_out"]

    # Reference matching the kernel numerics (bf16 MXU operands, f32 accum).
    ref_train = jnp.dot(x.astype(jnp.bfloat16), w_noisy.astype(jnp.bfloat16).T,
                        preferred_element_type=jnp.float32) + b_noisy
    ref_eval = jnp.dot(x.astype(jnp.bfloat16),
                       params["w_mu"].astype(jnp.bfloat16).T,
                       preferred_element_type=jnp.float32) + params["b_mu"]

    assert y_train.shape == (B, OUT_DIM) and y_eval.shape == (B, OUT_DIM)
    np.testing.assert_allclose(np.asarray(y_train), np.asarray(ref_train),
                               rtol=1e-4, atol=1e-4)
    np.testing.assert_allclose(np.asarray(y_eval), np.asarray(ref_eval),
                               rtol=1e-4, atol=1e-4)

    # Sanity against the full-f32 PyTorch-style reference (bf16 MXU tolerance).
    np.testing.assert_allclose(np.asarray(y_train),
                               np.asarray(x @ w_noisy.T + b_noisy),
                               rtol=5e-2, atol=5e-2)
    np.testing.assert_allclose(np.asarray(y_eval),
                               np.asarray(x @ params["w_mu"].T + params["b_mu"]),
                               rtol=5e-2, atol=5e-2)

    print("KERNEL_OK")
</pallas_src>

<mosaic_0001>
module attributes {stable_mosaic.version = 11 : i64} {
  func.func @_noisy_linear_train_kernel(%arg0: i32, %arg1: i32, %arg2: i32, %arg3: memref<8x128xf32, #tpu.memory_space<vmem>>, %arg4: memref<128x128xf32, #tpu.memory_space<vmem>>, %arg5: memref<128x128xf32, #tpu.memory_space<vmem>>, %arg6: memref<128x1xf32, #tpu.memory_space<vmem>>, %arg7: memref<1x128xf32, #tpu.memory_space<vmem>>, %arg8: memref<3x128xf32, #tpu.memory_space<vmem>>, %arg9: memref<8x128xf32, #tpu.memory_space<vmem>>, %arg10: memref<8x128xf32, #tpu.memory_space<vmem>>) attributes {dimension_semantics = [#tpu.dimension_semantics<parallel>, #tpu.dimension_semantics<parallel>, #tpu.dimension_semantics<arbitrary>], iteration_bounds = array<i64: 1, 1, 1>, scalar_prefetch = 0 : i64, scratch_operands = 1 : i64, tpu.core_type = #tpu.core_type<tc>, window_params = [{transform_indices = @transform_0, window_bounds = array<i64: 8, 128>}, {transform_indices = @transform_1, window_bounds = array<i64: 128, 128>}, {transform_indices = @transform_2, window_bounds = array<i64: 128, 128>}, {transform_indices = @transform_3, window_bounds = array<i64: 128, 1>}, {transform_indices = @transform_4, window_bounds = array<i64: 1, 128>}, {transform_indices = @transform_5, window_bounds = array<i64: 3, 128>}, {transform_indices = @transform_6, window_bounds = array<i64: 8, 128>}]} {
    %c0_i32 = arith.constant 0 : i32
    %0 = arith.cmpi eq, %arg2, %c0_i32 : i32
    %1 = arith.extui %0 : i1 to i32
    %c0_i32_0 = arith.constant 0 : i32
    %2 = arith.cmpi ne, %1, %c0_i32_0 : i32
    scf.if %2 {
      %cst_16 = arith.constant 0.000000e+00 : f32
      %22 = vector.broadcast %cst_16 : f32 to vector<8x128xf32>
      %c0_17 = arith.constant 0 : index
      %c0_18 = arith.constant 0 : index
      %23 = vector.load %arg10[%c0_17, %c0_18] : memref<8x128xf32, #tpu.memory_space<vmem>>, vector<8x128xf32>
      tpu.vector_store %arg10[%c0_17, %c0_18], %22 {strides = array<i32>} : memref<8x128xf32, #tpu.memory_space<vmem>>, vector<8x128xf32>,
    } else {
    }
    %c0 = arith.constant 0 : index
    %c0_1 = arith.constant 0 : index
    %3 = vector.load %arg4[%c0, %c0_1] : memref<128x128xf32, #tpu.memory_space<vmem>>, vector<128x128xf32>
    %c0_2 = arith.constant 0 : index
    %c0_3 = arith.constant 0 : index
    %4 = vector.load %arg5[%c0_2, %c0_3] : memref<128x128xf32, #tpu.memory_space<vmem>>, vector<128x128xf32>
    %c0_4 = arith.constant 0 : index
    %c0_5 = arith.constant 0 : index
    %5 = vector.load %arg6[%c0_4, %c0_5] : memref<128x1xf32, #tpu.memory_space<vmem>>, vector<128x1xf32>
    %c0_6 = arith.constant 0 : index
    %c0_7 = arith.constant 0 : index
    %6 = vector.load %arg7[%c0_6, %c0_7] : memref<1x128xf32, #tpu.memory_space<vmem>>, vector<1x128xf32>
    %7 = vector.broadcast %5 : vector<128x1xf32> to vector<128x128xf32>
    %8 = vector.broadcast %6 : vector<1x128xf32> to vector<128x128xf32>
    %9 = arith.mulf %7, %8 : vector<128x128xf32>
    %10 = arith.mulf %4, %9 : vector<128x128xf32>
    %11 = arith.addf %3, %10 : vector<128x128xf32>
    %c0_8 = arith.constant 0 : index
    %c0_9 = arith.constant 0 : index
    %12 = vector.load %arg10[%c0_8, %c0_9] : memref<8x128xf32, #tpu.memory_space<vmem>>, vector<8x128xf32>
    %c0_10 = arith.constant 0 : index
    %c0_11 = arith.constant 0 : index
    %13 = vector.load %arg3[%c0_10, %c0_11] : memref<8x128xf32, #tpu.memory_space<vmem>>, vector<8x128xf32>
    %14 = arith.truncf %13 : vector<8x128xf32> to vector<8x128xbf16>
    %15 = arith.truncf %11 : vector<128x128xf32> to vector<128x128xbf16>
    %cst = arith.constant dense<0.000000e+00> : vector<8x128xf32>
    %16 = tpu.matmul %14, %15, %cst {dimension_numbers = #tpu.dot_dimension_numbers<[1], [1], [0], [0], [0, 0, 1, 0], [], []>} : vector<8x128xbf16>, vector<128x128xbf16>, vector<8x128xf32> -> vector<8x128xf32>
    %17 = arith.addf %12, %16 : vector<8x128xf32>
    %c0_12 = arith.constant 0 : index
    %c0_13 = arith.constant 0 : index
    %18 = vector.load %arg10[%c0_12, %c0_13] : memref<8x128xf32, #tpu.memory_space<vmem>>, vector<8x128xf32>
    tpu.vector_store %arg10[%c0_12, %c0_13], %17 {strides = array<i32>} : memref<8x128xf32, #tpu.memory_space<vmem>>, vector<8x128xf32>,
    %c0_i32_14 = arith.constant 0 : i32
    %19 = arith.cmpi eq, %arg2, %c0_i32_14 : i32
    %20 = arith.extui %19 : i1 to i32
    %c0_i32_15 = arith.constant 0 : i32
    %21 = arith.cmpi ne, %20, %c0_i32_15 : i32
    scf.if %21 {
      %c0_16 = arith.constant 0 : index
      %c0_17 = arith.constant 0 : index
      %22 = vector.load %arg8[%c0_16, %c0_17] : memref<3x128xf32, #tpu.memory_space<vmem>>, vector<1x128xf32>
      %c1 = arith.constant 1 : index
      %c0_18 = arith.constant 0 : index
      %23 = vector.load %arg8[%c1, %c0_18] : memref<3x128xf32, #tpu.memory_space<vmem>>, vector<1x128xf32>
      %c2 = arith.constant 2 : index
      %c0_19 = arith.constant 0 : index
      %24 = vector.load %arg8[%c2, %c0_19] : memref<3x128xf32, #tpu.memory_space<vmem>>, vector<1x128xf32>
      %25 = arith.mulf %23, %24 : vector<1x128xf32>
      %26 = arith.addf %22, %25 : vector<1x128xf32>
      %c0_20 = arith.constant 0 : index
      %c0_21 = arith.constant 0 : index
      %27 = vector.load %arg10[%c0_20, %c0_21] : memref<8x128xf32, #tpu.memory_space<vmem>>, vector<8x128xf32>
      %28 = vector.broadcast %26 : vector<1x128xf32> to vector<8x128xf32>
      %29 = arith.addf %27, %28 : vector<8x128xf32>
      %c0_22 = arith.constant 0 : index
      %c0_23 = arith.constant 0 : index
      %30 = vector.load %arg9[%c0_22, %c0_23] : memref<8x128xf32, #tpu.memory_space<vmem>>, vector<8x128xf32>
      tpu.vector_store %arg9[%c0_22, %c0_23], %29 {strides = array<i32>} : memref<8x128xf32, #tpu.memory_space<vmem>>, vector<8x128xf32>,
    } else {
    }
    return
  }
  func.func @transform_0(%arg0: i32, %arg1: i32, %arg2: i32) -> (i32, i32) {
    %c0_i32 = arith.constant 0 : i32
    return %arg0, %arg2 : i32, i32
  }
  func.func @transform_1(%arg0: i32, %arg1: i32, %arg2: i32) -> (i32, i32) {
    %c0_i32 = arith.constant 0 : i32
    return %arg1, %arg2 : i32, i32
  }
  func.func @transform_2(%arg0: i32, %arg1: i32, %arg2: i32) -> (i32, i32) {
    %c0_i32 = arith.constant 0 : i32
    return %arg1, %arg2 : i32, i32
  }
  func.func @transform_3(%arg0: i32, %arg1: i32, %arg2: i32) -> (i32, i32) {
    %c0_i32 = arith.constant 0 : i32
    %c0_i32_0 = arith.constant 0 : i32
    return %arg1, %c0_i32 : i32, i32
  }
  func.func @transform_4(%arg0: i32, %arg1: i32, %arg2: i32) -> (i32, i32) {
    %c0_i32 = arith.constant 0 : i32
    %c0_i32_0 = arith.constant 0 : i32
    return %c0_i32, %arg2 : i32, i32
  }
  func.func @transform_5(%arg0: i32, %arg1: i32, %arg2: i32) -> (i32, i32) {
    %c0_i32 = arith.constant 0 : i32
    %c0_i32_0 = arith.constant 0 : i32
    return %c0_i32, %arg1 : i32, i32
  }
  func.func @transform_6(%arg0: i32, %arg1: i32, %arg2: i32) -> (i32, i32) {
    %c0_i32 = arith.constant 0 : i32
    return %arg0, %arg1 : i32, i32
  }
}

</mosaic_0001>

<llo_original>
// kernel: noisy_linear_forward.1
$region0: #{noisy_linear_forward.1}
  #allocation0 [shape = 'u32[]', space=smem, size = 0x4, offset = 0x4, fixed_abs, tag = 'smem constant byte address 0x4 - core index']
  #allocation1 [shape = 'u32[72,128]{1,0:T(1,128)}', space=vmem, size = 0x9000, scoped, tag = 'internal scratch']
  #allocation2 [shape = 'f32[8,128]{1,0:T(8,128)}', space=vmem, size = 0x1000, scoped, tag = 'scratch operand']
  %s0 = inlined_call_operand.vmem [shape: f32[8,128], index: 0, kind: input, shape index: {}]
  %s1 = inlined_call_operand.vmem [shape: f32[128,128], index: 1, kind: input, shape index: {}]
  %s2 = inlined_call_operand.vmem [shape: f32[128,128], index: 2, kind: input, shape index: {}]
  %s3 = inlined_call_operand.vmem [shape: f32[128,1], index: 3, kind: input, shape index: {}]
  %s4 = inlined_call_operand.vmem [shape: f32[1,128], index: 4, kind: input, shape index: {}]
  %s5 = inlined_call_operand.vmem [shape: f32[3,128], index: 5, kind: input, shape index: {}]
  %s6 = inlined_call_operand.hbm [shape: f32[8,128], index: 6, kind: output, shape index: {}]
  %s7 = sld [smem:[#allocation0]]
  $region42: #{noisy_linear_forward.1} parent=0
    _
  %s9 = ssub.s32 1, %s7
  %s10 = scalar_select 0, %s9, %s7
  $region1: #{noisy_linear_forward.1} parent=0
    #allocation3 [shape = 'u8[4096]{0}', space=vmem, size = 0x1000, scoped, tag = 'output window, operand 0, single buffered']
    #allocation4 [shape = 's32[1]{0}', space=sflag, size = 0x4, scoped, tag = 'scoped memory for noisy_linear_forward.1']
    %11 = vsyncpa [#allocation4], 0
    // Predicated region
    $region2: #{noisy_linear_forward.1} parent=1 // pred_check
      _
    $region3: #{noisy_linear_forward.1} parent=1 // pred_check_branch
      %13 = sbr.rel (0) target = $region5
    $region4: #{noisy_linear_forward.1} parent=1 // pred_region
      _
    $region5: #{noisy_linear_forward.1} parent=1 // pred_fallthru
      _
    // Predicated region
    $region6: #{noisy_linear_forward.1} parent=1 // pred_check
      _
    $region7: #{noisy_linear_forward.1} parent=1 // pred_check_branch
      %15 = sbr.rel (0) target = $region9
    $region8: #{noisy_linear_forward.1} parent=1 // pred_region
      _
    $region9: #{noisy_linear_forward.1} parent=1 // pred_fallthru
      _
    // Predicated region
    $region10: #{noisy_linear_forward.1} parent=1 // pred_check
      _
    $region11: #{noisy_linear_forward.1} parent=1 // pred_check_branch
      %17 = sbr.rel (0) target = $region13
    $region12: #{noisy_linear_forward.1} parent=1 // pred_region
      _
    $region13: #{noisy_linear_forward.1} parent=1 // pred_fallthru
      _
    // Predicated region
    $region14: #{noisy_linear_forward.1} parent=1 // pred_check
      _
    $region15: #{noisy_linear_forward.1} parent=1 // pred_check_branch
      %19 = sbr.rel (0) target = $region17
    $region16: #{noisy_linear_forward.1} parent=1 // pred_region
      _
    $region17: #{noisy_linear_forward.1} parent=1 // pred_fallthru
      _
    // Predicated region
    $region18: #{noisy_linear_forward.1} parent=1 // pred_check
      _
    $region19: #{noisy_linear_forward.1} parent=1 // pred_check_branch
      %21 = sbr.rel (0) target = $region21
    $region20: #{noisy_linear_forward.1} parent=1 // pred_region
      _
    $region21: #{noisy_linear_forward.1} parent=1 // pred_fallthru
      _
    // Predicated region
    $region22: #{noisy_linear_forward.1} parent=1 // pred_check
      _
    $region23: #{noisy_linear_forward.1} parent=1 // pred_check_branch
      %23 = sbr.rel (0) target = $region25
    $region24: #{noisy_linear_forward.1} parent=1 // pred_region
      _
    $region25: #{noisy_linear_forward.1} parent=1 // pred_fallthru
      _
    %p24 = scmp.eq.s32.totalorder 0, 0
    // Predicated region
    $region26: #{noisy_linear_forward.1} parent=1 // pred_check
      %p25 = pneg %p24
    $region27: #{noisy_linear_forward.1} parent=1 // pred_check_branch
      %27 = sbr.rel (%p25) target = $region29
    $region28: #{noisy_linear_forward.1} parent=1 // pred_region
      %28 = vst [vmem:[#allocation2] sm:$0xff] 0.0
    $region29: #{noisy_linear_forward.1} parent=1 // pred_fallthru
      _
    %v29 = vld [vmem:[%s1] sm:$0xff]
    %v30 = vld [vmem:[%s1 + $0x8] sm:$0xff]
    %v31 = vld [vmem:[%s1 + $0x10] sm:$0xff]
    %v32 = vld [vmem:[%s1 + $0x18] sm:$0xff]
    %v33 = vld [vmem:[%s1 + $0x20] sm:$0xff]
    %v34 = vld [vmem:[%s1 + $0x28] sm:$0xff]
    %v35 = vld [vmem:[%s1 + $0x30] sm:$0xff]
    %v36 = vld [vmem:[%s1 + $0x38] sm:$0xff]
    %v37 = vld [vmem:[%s1 + $0x40] sm:$0xff]
    %v38 = vld [vmem:[%s1 + $0x48] sm:$0xff]
    %v39 = vld [vmem:[%s1 + $0x50] sm:$0xff]
    %v40 = vld [vmem:[%s1 + $0x58] sm:$0xff]
    %v41 = vld [vmem:[%s1 + $0x60] sm:$0xff]
    %v42 = vld [vmem:[%s1 + $0x68] sm:$0xff]
    %v43 = vld [vmem:[%s1 + $0x70] sm:$0xff]
    %v44 = vld [vmem:[%s1 + $0x78] sm:$0xff]
    %v45 = vld [vmem:[%s2] sm:$0xff]
    %v46 = vld [vmem:[%s2 + $0x8] sm:$0xff]
    %v47 = vld [vmem:[%s2 + $0x10] sm:$0xff]
    %v48 = vld [vmem:[%s2 + $0x18] sm:$0xff]
    %v49 = vld [vmem:[%s2 + $0x20] sm:$0xff]
    %v50 = vld [vmem:[%s2 + $0x28] sm:$0xff]
    %v51 = vld [vmem:[%s2 + $0x30] sm:$0xff]
    %v52 = vld [vmem:[%s2 + $0x38] sm:$0xff]
    %v53 = vld [vmem:[%s2 + $0x40] sm:$0xff]
    %v54 = vld [vmem:[%s2 + $0x48] sm:$0xff]
    %v55 = vld [vmem:[%s2 + $0x50] sm:$0xff]
    %v56 = vld [vmem:[%s2 + $0x58] sm:$0xff]
    %v57 = vld [vmem:[%s2 + $0x60] sm:$0xff]
    %v58 = vld [vmem:[%s2 + $0x68] sm:$0xff]
    %v59 = vld [vmem:[%s2 + $0x70] sm:$0xff]
    %v60 = vld [vmem:[%s2 + $0x78] sm:$0xff]
    %v61 = vld [vmem:[%s3] sm:$0xff]
    %v62 = vld [vmem:[%s3 + $0x8] sm:$0xff]
    %v63 = vld [vmem:[%s3 + $0x10] sm:$0xff]
    %v64 = vld [vmem:[%s3 + $0x18] sm:$0xff]
    %v65 = vld [vmem:[%s3 + $0x20] sm:$0xff]
    %v66 = vld [vmem:[%s3 + $0x28] sm:$0xff]
    %v67 = vld [vmem:[%s3 + $0x30] sm:$0xff]
    %v68 = vld [vmem:[%s3 + $0x38] sm:$0xff]
    %v69 = vld [vmem:[%s3 + $0x40] sm:$0xff]
    %v70 = vld [vmem:[%s3 + $0x48] sm:$0xff]
    %v71 = vld [vmem:[%s3 + $0x50] sm:$0xff]
    %v72 = vld [vmem:[%s3 + $0x58] sm:$0xff]
    %v73 = vld [vmem:[%s3 + $0x60] sm:$0xff]
    %v74 = vld [vmem:[%s3 + $0x68] sm:$0xff]
    %v75 = vld [vmem:[%s3 + $0x70] sm:$0xff]
    %v76 = vld [vmem:[%s3 + $0x78] sm:$0xff]
    %v77 = vld [vmem:[%s4] sm:$0x1]
    %79 = vset.pattern.permute.xlu0 0
    %80 = vperm.xlu0 %79, %v61
    %v81 = vpop.permute.xlu0 %80
    %84 = vset.pattern.permute.xlu0 0
    %85 = vperm.xlu0 %84, %v62
    %v86 = vpop.permute.xlu0 %85
    %89 = vset.pattern.permute.xlu0 0
    %90 = vperm.xlu0 %89, %v63
    %v91 = vpop.permute.xlu0 %90
    %94 = vset.pattern.permute.xlu0 0
    %95 = vperm.xlu0 %94, %v64
    %v96 = vpop.permute.xlu0 %95
    %99 = vset.pattern.permute.xlu0 0
    %100 = vperm.xlu0 %99, %v65
    %v101 = vpop.permute.xlu0 %100
    %104 = vset.pattern.permute.xlu0 0
    %105 = vperm.xlu0 %104, %v66
    %v106 = vpop.permute.xlu0 %105
    %109 = vset.pattern.permute.xlu0 0
    %110 = vperm.xlu0 %109, %v67
    %v111 = vpop.permute.xlu0 %110
    %114 = vset.pattern.permute.xlu0 0
    %115 = vperm.xlu0 %114, %v68
    %v116 = vpop.permute.xlu0 %115
    %119 = vset.pattern.permute.xlu0 0
    %120 = vperm.xlu0 %119, %v69
    %v121 = vpop.permute.xlu0 %120
    %124 = vset.pattern.permute.xlu0 0
    %125 = vperm.xlu0 %124, %v70
    %v126 = vpop.permute.xlu0 %125
    %129 = vset.pattern.permute.xlu0 0
    %130 = vperm.xlu0 %129, %v71
    %v131 = vpop.permute.xlu0 %130
    %134 = vset.pattern.permute.xlu0 0
    %135 = vperm.xlu0 %134, %v72
    %v136 = vpop.permute.xlu0 %135
    %139 = vset.pattern.permute.xlu0 0
    %140 = vperm.xlu0 %139, %v73
    %v141 = vpop.permute.xlu0 %140
    %144 = vset.pattern.permute.xlu0 0
    %145 = vperm.xlu0 %144, %v74
    %v146 = vpop.permute.xlu0 %145
    %149 = vset.pattern.permute.xlu0 0
    %150 = vperm.xlu0 %149, %v75
    %v151 = vpop.permute.xlu0 %150
    %154 = vset.pattern.permute.xlu0 0
    %155 = vperm.xlu0 %154, %v76
    %v156 = vpop.permute.xlu0 %155
    %v159 = vperm.slane %v77, 0
    %v161 = vmul.f32 %v81, %v159
    %v162 = vmul.f32 %v86, %v159
    %v163 = vmul.f32 %v91, %v159
    %v164 = vmul.f32 %v96, %v159
    %v165 = vmul.f32 %v101, %v159
    %v166 = vmul.f32 %v106, %v159
    %v167 = vmul.f32 %v111, %v159
    %v168 = vmul.f32 %v116, %v159
    %v169 = vmul.f32 %v121, %v159
    %v170 = vmul.f32 %v126, %v159
    %v171 = vmul.f32 %v131, %v159
    %v172 = vmul.f32 %v136, %v159
    %v173 = vmul.f32 %v141, %v159
    %v174 = vmul.f32 %v146, %v159
    %v175 = vmul.f32 %v151, %v159
    %v176 = vmul.f32 %v156, %v159
    %v177 = vmul.f32 %v45, %v161
    %v178 = vmul.f32 %v46, %v162
    %v179 = vmul.f32 %v47, %v163
    %v180 = vmul.f32 %v48, %v164
    %v181 = vmul.f32 %v49, %v165
    %v182 = vmul.f32 %v50, %v166
    %v183 = vmul.f32 %v51, %v167
    %v184 = vmul.f32 %v52, %v168
    %v185 = vmul.f32 %v53, %v169
    %v186 = vmul.f32 %v54, %v170
    %v187 = vmul.f32 %v55, %v171
    %v188 = vmul.f32 %v56, %v172
    %v189 = vmul.f32 %v57, %v173
    %v190 = vmul.f32 %v58, %v174
    %v191 = vmul.f32 %v59, %v175
    %v192 = vmul.f32 %v60, %v176
    %v193 = vadd.f32 %v29, %v177
    %v194 = vadd.f32 %v30, %v178
    %v195 = vadd.f32 %v31, %v179
    %v196 = vadd.f32 %v32, %v180
    %v197 = vadd.f32 %v33, %v181
    %v198 = vadd.f32 %v34, %v182
    %v199 = vadd.f32 %v35, %v183
    %v200 = vadd.f32 %v36, %v184
    %v201 = vadd.f32 %v37, %v185
    %v202 = vadd.f32 %v38, %v186
    %v203 = vadd.f32 %v39, %v187
    %v204 = vadd.f32 %v40, %v188
    %v205 = vadd.f32 %v41, %v189
    %v206 = vadd.f32 %v42, %v190
    %v207 = vadd.f32 %v43, %v191
    %v208 = vadd.f32 %v44, %v192
    %v209 = vld [vmem:[#allocation2] sm:$0xff]
    %v210 = vld [vmem:[%s0] sm:$0xff]
    %v211 = vpack.c.bf16 %v210, %v210
    %v212 = vpack.c.bf16 %v194, %v193
    %v213 = vpack.c.bf16 %v196, %v195
    %v214 = vpack.c.bf16 %v198, %v197
    %v215 = vpack.c.bf16 %v200, %v199
    %v216 = vpack.c.bf16 %v202, %v201
    %v217 = vpack.c.bf16 %v204, %v203
    %v218 = vpack.c.bf16 %v206, %v205
    %v219 = vpack.c.bf16 %v208, %v207
    %220 = vmatpush.bf16.xpose.msra.mxu0 %v219
    %221 = vmatpush.bf16.xpose.msra.mxu0 %v218
    %222 = vmatpush.bf16.xpose.msra.mxu0 %v217
    %223 = vmatpush.bf16.xpose.msra.mxu0 %v216
    %224 = vmatpush.bf16.xpose.msra.mxu0 %v215
    %225 = vmatpush.bf16.xpose.msra.mxu0 %v214
    %226 = vmatpush.bf16.xpose.msra.mxu0 %v213
    %227 = vmatpush.bf16.xpose.msra.mxu0 %v212
    %228 = vmatmul.bf16.gmra.mxu0 %v211
    %v229 = vpop.f32.mrf.mxu0
    %v230 = vadd.f32 0.0, %v229
    %v231 = vpop.f32.mrf.mxu0
    %232 = vdwg.mxu0
    %v233 = vadd.f32 %v209, %v230
    %234 = vst [vmem:[#allocation2] sm:$0xff] %v233
    // Predicated region
    $region30: #{noisy_linear_forward.1} parent=1 // pred_check
      %p235 = pneg %p24
    $region31: #{noisy_linear_forward.1} parent=1 // pred_check_branch
      %237 = sbr.rel (%p235) target = $region33
    $region32: #{noisy_linear_forward.1} parent=1 // pred_region
      %v238 = vld [vmem:[%s5] sm:$0x1]
      %v239 = vld [vmem:[%s5 + $0x1] sm:$0x1]
      %v240 = vld [vmem:[%s5 + $0x2] sm:$0x1]
      %v241 = vmul.f32 %v239, %v240
      %v242 = vadd.f32 %v238, %v241
      %v243 = vld [vmem:[#allocation2] sm:$0xff]
      %v244 = vperm.slane %v242, 0
      %v245 = vadd.f32 %v243, %v244
      %246 = vst [vmem:[#allocation3] sm:$0xff] %v245
    $region33: #{noisy_linear_forward.1} parent=1 // pred_fallthru
      _
    // Predicated region
    $region34: #{noisy_linear_forward.1} parent=1 // pred_check
      _
    $region35: #{noisy_linear_forward.1} parent=1 // pred_check_branch
      %248 = sbr.rel (0) target = $region37
    $region36: #{noisy_linear_forward.1} parent=1 // pred_region
      %250 = vsyncadd [#allocation4], 0
      %s252 = sshll.u32 [#allocation3], 4
      %s253 = int_to_ptr.vmem [resolvable:$true] %s252
      %s254 = sshll.u32 %s6, 4
      %s255 = int_to_ptr.hbm [resolvable:$true] %s254
      %257 = dma.vmem_to_hbm [thread:$0]  %s253, 128, %s255, [#allocation4]
    $region37: #{noisy_linear_forward.1} parent=1 // pred_fallthru
      _
    // Predicated region
    $region38: #{noisy_linear_forward.1} parent=1 // pred_check
      _
    $region39: #{noisy_linear_forward.1} parent=1 // pred_check_branch
      %259 = sbr.rel (0) target = $region41
    $region40: #{noisy_linear_forward.1} parent=1 // pred_region
      %261 = dma.done [#allocation4], 128
    $region41: #{noisy_linear_forward.1} parent=1 // pred_fallthru
      _
    %262 = vsyncpa [#allocation4], 1

</llo_original>
